<compile_context>
chip_gen: v7x
topology: tpu7x:2x2x1
jax: 0.10.0
libtpu: 0.0.40
codegen_flags: <defaults>
</compile_context>

<pallas_src>
import math

import jax
import jax.numpy as jnp
from jax.experimental import pallas as pl
from jax.experimental.pallas import tpu as pltpu

HIDDEN = 256


def _round_up(x, m):
    return ((x + m - 1) // m) * m


def _policy_kernel(x_ref, w1_ref, b1_ref, w2_ref, b2_ref, w3_ref, b3_ref,
                   out_ref):
    # x: [TB, D] f32, w1: [D, 256] bf16, w2: [256, 256] bf16,
    # w3: [1, 256] f32 (row), b*: f32, b3: SMEM (1, 1) scalar.
    x = x_ref[...].astype(jnp.bfloat16)

    # Layer 1: MXU matmul (bf16 operands, f32 accumulate), bias + ReLU in f32.
    h1 = jnp.dot(x, w1_ref[...], preferred_element_type=jnp.float32)
    h1 = jnp.maximum(h1 + b1_ref[...], 0.0)

    # Layer 2 (>90% of the FLOPs): bf16 MXU matmul, f32 accumulate.
    h2 = jnp.dot(h1.astype(jnp.bfloat16), w2_ref[...],
                 preferred_element_type=jnp.float32)
    h2 = jnp.maximum(h2 + b2_ref[...], 0.0)

    # Final 256 -> 1 layer: VPU multiply + XLU cross-lane reduce in f32
    # (an N=1 MXU matmul would waste the systolic array / result FIFO).
    logits = jnp.sum(h2 * w3_ref[...], axis=-1, keepdims=True) + b3_ref[0, 0]

    # Exact sigmoid (exp on EUP, full-precision divide).
    out_ref[...] = 1.0 / (1.0 + jnp.exp(-logits))


def policy_forward(state, params, *, batch_tile=1024):
    """state: [B, state_dim] f32 -> prob: [B, 1] f32."""
    w1, b1, w2, b2, w3, b3 = params
    B, D = state.shape

    # Cast resident MXU weights to bf16 once (halves weight VMEM + DMA).
    w1 = w1.astype(jnp.bfloat16)
    w2 = w2.astype(jnp.bfloat16)

    # Batch tile: multiple of 8 sublanes, large enough to amortize per-step
    # overhead, but capped so the "parallel" batch axis has >= 2 grid steps
    # whenever B allows it (v7x has 2 TensorCores; v5e/v6e just loop).
    TB = min(_round_up(batch_tile, 8), _round_up(B, 8))
    half = _round_up((B + 1) // 2, 8)
    TB = max(min(TB, half), 8)

    B_pad = _round_up(B, TB)
    if B_pad != B:
        state = jnp.pad(state, ((0, B_pad - B), (0, 0)))

    flops = 2 * B_pad * (D * HIDDEN + HIDDEN * HIDDEN + HIDDEN)
    bytes_accessed = (B_pad * D * 4 + B_pad * 4          # input + output
                      + w1.size * 2 + w2.size * 2         # bf16 weights
                      + (b1.size + b2.size + w3.size + b3.size) * 4)

    out = pl.pallas_call(
        _policy_kernel,
        out_shape=jax.ShapeDtypeStruct((B_pad, 1), jnp.float32),
        grid=(B_pad // TB,),
        in_specs=[
            pl.BlockSpec((TB, D), lambda i: (i, 0)),              # x: batch-tiled
            pl.BlockSpec((D, HIDDEN), lambda i: (0, 0)),          # w1 (bf16), resident
            pl.BlockSpec((1, HIDDEN), lambda i: (0, 0)),          # b1, resident
            pl.BlockSpec((HIDDEN, HIDDEN), lambda i: (0, 0)),     # w2 (bf16), resident
            pl.BlockSpec((1, HIDDEN), lambda i: (0, 0)),          # b2, resident
            pl.BlockSpec((1, HIDDEN), lambda i: (0, 0)),          # w3 row (f32), resident
            pl.BlockSpec(memory_space=pltpu.MemorySpace.SMEM),    # b3: SMEM scalar
        ],
        out_specs=pl.BlockSpec((TB, 1), lambda i: (i, 0)),        # narrow 4 B/row output
        compiler_params=pltpu.CompilerParams(
            dimension_semantics=("parallel",),
            vmem_limit_bytes=32 * 1024 * 1024,
        ),
        cost_estimate=pl.CostEstimate(
            flops=flops,
            transcendentals=B_pad,
            bytes_accessed=bytes_accessed,
        ),
    )(state, w1, b1, w2, b2, w3, b3)

    if B_pad != B:
        out = out[:B]
    return out


def init_params(key, state_dim):
    """Deterministic init matching PyTorch: xavier_uniform_ weights,
    default Linear bias init U(-1/sqrt(fan_in), 1/sqrt(fan_in)).
    w1/w2 are stored transposed ([in, out]); w3 is stored as a [1, 256] row."""
    ks = jax.random.split(key, 6)

    def xavier(k, fan_in, fan_out, shape):
        bound = math.sqrt(6.0 / (fan_in + fan_out))
        return jax.random.uniform(k, shape, jnp.float32,
                                  minval=-bound, maxval=bound)

    def bias(k, fan_in, shape):
        bound = 1.0 / math.sqrt(fan_in)
        return jax.random.uniform(k, shape, jnp.float32,
                                  minval=-bound, maxval=bound)

    w1 = xavier(ks[0], state_dim, HIDDEN, (state_dim, HIDDEN))
    b1 = bias(ks[1], state_dim, (1, HIDDEN))
    w2 = xavier(ks[2], HIDDEN, HIDDEN, (HIDDEN, HIDDEN))
    b2 = bias(ks[3], HIDDEN, (1, HIDDEN))
    w3 = xavier(ks[4], HIDDEN, 1, (1, HIDDEN))    # row layout for VPU reduce
    b3 = bias(ks[5], HIDDEN, (1, 1))
    return (w1, b1, w2, b2, w3, b3)


if __name__ == "__main__":
    key = jax.random.PRNGKey(0)
    k_params, k_state = jax.random.split(key)

    batch, state_dim = 8, 16
    params = init_params(k_params, state_dim)
    state = jax.random.normal(k_state, (batch, state_dim), jnp.float32)

    prob = policy_forward(state, params)
    jax.block_until_ready(prob)

    # Sanity vs. plain-JAX f32 reference (kernel uses bf16 MXU operands,
    # so the tolerance is loosened accordingly).
    w1, b1, w2, b2, w3, b3 = params
    h = jnp.maximum(state @ w1 + b1, 0.0)
    h = jnp.maximum(h @ w2 + b2, 0.0)
    ref = jax.nn.sigmoid(h @ w3.T + b3)
    assert prob.shape == (batch, 1)
    assert jnp.max(jnp.abs(prob - ref)) < 2e-2
    assert bool(jnp.all((prob >= 0.0) & (prob <= 1.0)))

    print("KERNEL_OK")
</pallas_src>

<mosaic_0001>
module attributes {stable_mosaic.version = 11 : i64} {
  func.func @_policy_kernel(%arg0: i32, %arg1: memref<8x16xf32, #tpu.memory_space<vmem>>, %arg2: memref<16x256xbf16, #tpu.memory_space<vmem>>, %arg3: memref<1x256xf32, #tpu.memory_space<vmem>>, %arg4: memref<256x256xbf16, #tpu.memory_space<vmem>>, %arg5: memref<1x256xf32, #tpu.memory_space<vmem>>, %arg6: memref<1x256xf32, #tpu.memory_space<vmem>>, %arg7: memref<1x1xf32, #tpu.memory_space<smem>>, %arg8: memref<8x1xf32, #tpu.memory_space<vmem>>) attributes {dimension_semantics = [#tpu.dimension_semantics<parallel>], iteration_bounds = array<i64: 1>, scalar_prefetch = 0 : i64, scratch_operands = 0 : i64, tpu.core_type = #tpu.core_type<tc>, window_params = [{transform_indices = @transform_0, window_bounds = array<i64: 8, 16>}, {pipeline_mode = #tpu.pipeline_mode<synchronous>, transform_indices = @transform_1, window_bounds = array<i64: 16, 256>}, {pipeline_mode = #tpu.pipeline_mode<synchronous>, transform_indices = @transform_2, window_bounds = array<i64: 1, 256>}, {pipeline_mode = #tpu.pipeline_mode<synchronous>, transform_indices = @transform_3, window_bounds = array<i64: 256, 256>}, {pipeline_mode = #tpu.pipeline_mode<synchronous>, transform_indices = @transform_4, window_bounds = array<i64: 1, 256>}, {pipeline_mode = #tpu.pipeline_mode<synchronous>, transform_indices = @transform_5, window_bounds = array<i64: 1, 256>}, {transform_indices = @transform_6, window_bounds = array<i64: 1, 1>}, {transform_indices = @transform_7, window_bounds = array<i64: 8, 1>}]} {
    %c0 = arith.constant 0 : index
    %c0_0 = arith.constant 0 : index
    %0 = vector.load %arg1[%c0, %c0_0] : memref<8x16xf32, #tpu.memory_space<vmem>>, vector<8x16xf32>
    %1 = arith.truncf %0 : vector<8x16xf32> to vector<8x16xbf16>
    %c0_1 = arith.constant 0 : index
    %c0_2 = arith.constant 0 : index
    %2 = vector.load %arg2[%c0_1, %c0_2] : memref<16x256xbf16, #tpu.memory_space<vmem>>, vector<16x256xbf16>
    %cst = arith.constant dense<0.000000e+00> : vector<8x256xf32>
    %3 = tpu.matmul %1, %2, %cst {dimension_numbers = #tpu.dot_dimension_numbers<[1], [0], [0], [1], [0, 0, 1, 1], [], []>} : vector<8x16xbf16>, vector<16x256xbf16>, vector<8x256xf32> -> vector<8x256xf32>
    %c0_3 = arith.constant 0 : index
    %c0_4 = arith.constant 0 : index
    %4 = vector.load %arg3[%c0_3, %c0_4] : memref<1x256xf32, #tpu.memory_space<vmem>>, vector<1x256xf32>
    %5 = vector.broadcast %4 : vector<1x256xf32> to vector<8x256xf32>
    %6 = arith.addf %3, %5 : vector<8x256xf32>
    %cst_5 = arith.constant 0.000000e+00 : f32
    %7 = vector.broadcast %cst_5 : f32 to vector<8x256xf32>
    %8 = arith.maximumf %6, %7 : vector<8x256xf32>
    %9 = arith.truncf %8 : vector<8x256xf32> to vector<8x256xbf16>
    %c0_6 = arith.constant 0 : index
    %c0_7 = arith.constant 0 : index
    %10 = vector.load %arg4[%c0_6, %c0_7] : memref<256x256xbf16, #tpu.memory_space<vmem>>, vector<256x256xbf16>
    %cst_8 = arith.constant dense<0.000000e+00> : vector<8x256xf32>
    %11 = tpu.matmul %9, %10, %cst_8 {dimension_numbers = #tpu.dot_dimension_numbers<[1], [0], [0], [1], [0, 0, 1, 1], [], []>} : vector<8x256xbf16>, vector<256x256xbf16>, vector<8x256xf32> -> vector<8x256xf32>
    %c0_9 = arith.constant 0 : index
    %c0_10 = arith.constant 0 : index
    %12 = vector.load %arg5[%c0_9, %c0_10] : memref<1x256xf32, #tpu.memory_space<vmem>>, vector<1x256xf32>
    %13 = vector.broadcast %12 : vector<1x256xf32> to vector<8x256xf32>
    %14 = arith.addf %11, %13 : vector<8x256xf32>
    %cst_11 = arith.constant 0.000000e+00 : f32
    %15 = vector.broadcast %cst_11 : f32 to vector<8x256xf32>
    %16 = arith.maximumf %14, %15 : vector<8x256xf32>
    %c0_12 = arith.constant 0 : index
    %c0_13 = arith.constant 0 : index
    %17 = vector.load %arg6[%c0_12, %c0_13] : memref<1x256xf32, #tpu.memory_space<vmem>>, vector<1x256xf32>
    %18 = vector.broadcast %17 : vector<1x256xf32> to vector<8x256xf32>
    %19 = arith.mulf %16, %18 : vector<8x256xf32>
    %cst_14 = arith.constant dense<0.000000e+00> : vector<8xf32>
    %20 = vector.multi_reduction <add>, %19, %cst_14 [1] : vector<8x256xf32> to vector<8xf32>
    %21 = vector.shape_cast %20 : vector<8xf32> to vector<8x1xf32>
    %c0_15 = arith.constant 0 : index
    %c0_16 = arith.constant 0 : index
    %22 = memref.load %arg7[%c0_15, %c0_16] : memref<1x1xf32, #tpu.memory_space<smem>>
    %23 = vector.broadcast %22 : f32 to vector<8x1xf32>
    %24 = arith.addf %21, %23 : vector<8x1xf32>
    %cst_17 = arith.constant 0.000000e+00 : f32
    %25 = vector.broadcast %cst_17 : f32 to vector<8x1xf32>
    %26 = arith.subf %25, %24 : vector<8x1xf32>
    %27 = math.exp %26 : vector<8x1xf32>
    %cst_18 = arith.constant 1.000000e+00 : f32
    %28 = vector.broadcast %cst_18 : f32 to vector<8x1xf32>
    %29 = arith.addf %28, %27 : vector<8x1xf32>
    %cst_19 = arith.constant 1.000000e+00 : f32
    %30 = vector.broadcast %cst_19 : f32 to vector<8x1xf32>
    %31 = arith.divf %30, %29 : vector<8x1xf32>
    %c0_20 = arith.constant 0 : index
    %c0_21 = arith.constant 0 : index
    %32 = vector.load %arg8[%c0_20, %c0_21] : memref<8x1xf32, #tpu.memory_space<vmem>>, vector<8x1xf32>
    tpu.vector_store %arg8[%c0_20, %c0_21], %31 {strides = array<i32>} : memref<8x1xf32, #tpu.memory_space<vmem>>, vector<8x1xf32>,
    return
  }
  func.func @transform_0(%arg0: i32) -> (i32, i32) {
    %c0_i32 = arith.constant 0 : i32
    %c0_i32_0 = arith.constant 0 : i32
    return %arg0, %c0_i32 : i32, i32
  }
  func.func @transform_1(%arg0: i32) -> (i32, i32) {
    %c0_i32 = arith.constant 0 : i32
    %c0_i32_0 = arith.constant 0 : i32
    %c0_i32_1 = arith.constant 0 : i32
    return %c0_i32, %c0_i32_0 : i32, i32
  }
  func.func @transform_2(%arg0: i32) -> (i32, i32) {
    %c0_i32 = arith.constant 0 : i32
    %c0_i32_0 = arith.constant 0 : i32
    %c0_i32_1 = arith.constant 0 : i32
    return %c0_i32, %c0_i32_0 : i32, i32
  }
  func.func @transform_3(%arg0: i32) -> (i32, i32) {
    %c0_i32 = arith.constant 0 : i32
    %c0_i32_0 = arith.constant 0 : i32
    %c0_i32_1 = arith.constant 0 : i32
    return %c0_i32, %c0_i32_0 : i32, i32
  }
  func.func @transform_4(%arg0: i32) -> (i32, i32) {
    %c0_i32 = arith.constant 0 : i32
    %c0_i32_0 = arith.constant 0 : i32
    %c0_i32_1 = arith.constant 0 : i32
    return %c0_i32, %c0_i32_0 : i32, i32
  }
  func.func @transform_5(%arg0: i32) -> (i32, i32) {
    %c0_i32 = arith.constant 0 : i32
    %c0_i32_0 = arith.constant 0 : i32
    %c0_i32_1 = arith.constant 0 : i32
    return %c0_i32, %c0_i32_0 : i32, i32
  }
  func.func @transform_6(%arg0: i32) -> (i32, i32) {
    %c0_i32 = arith.constant 0 : i32
    %c0_i32_0 = arith.constant 0 : i32
    %c0_i32_1 = arith.constant 0 : i32
    return %c0_i32, %c0_i32_0 : i32, i32
  }
  func.func @transform_7(%arg0: i32) -> (i32, i32) {
    %c0_i32 = arith.constant 0 : i32
    %c0_i32_0 = arith.constant 0 : i32
    return %arg0, %c0_i32 : i32, i32
  }
}

</mosaic_0001>

<llo_original>
// kernel: tpu_custom_call.1
$region0: #{tpu_custom_call.1}
  #allocation0 [shape = 'u32[]', space=smem, size = 0x4, offset = 0x4, fixed_abs, tag = 'smem constant byte address 0x4 - core index']
  #allocation1 [shape = 'u32[144,128]{1,0:T(1,128)}', space=vmem, size = 0x12000, scoped, tag = 'internal scratch']
  #allocation2 [shape = 'f32[1,1]{1,0:T(1,128)S(6)}', space=smem, size = 0x200, scoped, tag = 'scoped memory for tpu_custom_call.1']
  %s0 = inlined_call_operand.hbm [shape: f32[8,16], index: 0, kind: input, shape index: {}]
  %s1 = inlined_call_operand.hbm [shape: bf16[16,256], index: 1, kind: input, shape index: {}]
  %s2 = inlined_call_operand.vmem [shape: f32[1,256], index: 2, kind: input, shape index: {}]
  %s3 = inlined_call_operand.hbm [shape: bf16[256,256], index: 3, kind: input, shape index: {}]
  %s4 = inlined_call_operand.vmem [shape: f32[1,256], index: 4, kind: input, shape index: {}]
  %s5 = inlined_call_operand.vmem [shape: f32[1,256], index: 5, kind: input, shape index: {}]
  %s6 = inlined_call_operand.<no memory space> [shape: f32[1,1], index: 6, kind: input, shape index: {}]
  %s7 = inlined_call_operand.vmem [shape: f32[8,1], index: 7, kind: output, shape index: {}]
  %s8 = sld [smem:[#allocation0]]
  $region50: #{tpu_custom_call.1} parent=0
    _
  %s10 = ssub.s32 1, %s8
  %s11 = scalar_select 0, %s10, %s8
  %12 = sst [smem:[#allocation2]] %s6
  $region1: #{tpu_custom_call.1} parent=0
    #allocation3 [shape = 'u8[4096]{0}', space=vmem, size = 0x1000, scoped, tag = 'input window, operand 0, single buffered']
    #allocation4 [shape = 's32[1]{0}', space=sflag, size = 0x4, scoped, tag = 'scoped memory for tpu_custom_call.1']
    #allocation5 [shape = 'u8[8192]{0}', space=vmem, size = 0x2000, scoped, tag = 'input window, operand 1, single buffered']
    #allocation6 [shape = 's32[1]{0}', space=sflag, size = 0x4, scoped, tag = 'scoped memory for tpu_custom_call.1']
    #allocation7 [shape = 'u8[131072]{0}', space=vmem, size = 0x20000, scoped, tag = 'input window, operand 3, single buffered']
    %13 = vsyncpa [#allocation4], 0
    %14 = vsyncpa [#allocation6], 0
    // Predicated region
    $region2: #{tpu_custom_call.1} parent=1 // pred_check
      _
    $region3: #{tpu_custom_call.1} parent=1 // pred_check_branch
      %16 = sbr.rel (0) target = $region5
    $region4: #{tpu_custom_call.1} parent=1 // pred_region
      %s18 = ssub.s32 128, 128
      %19 = vsyncadd [#allocation4], %s18
      %s21 = sshll.u32 [#allocation3], 4
      %s22 = int_to_ptr.vmem [resolvable:$true] %s21
      %24 = dma.hbm_to_vmem [thread:$0]  %s0, 128, %s22, [#allocation4]
    $region5: #{tpu_custom_call.1} parent=1 // pred_fallthru
      _
    // Predicated region
    $region6: #{tpu_custom_call.1} parent=1 // pred_check
      _
    $region7: #{tpu_custom_call.1} parent=1 // pred_check_branch
      %26 = sbr.rel (0) target = $region9
    $region8: #{tpu_custom_call.1} parent=1 // pred_region
      %s28 = ssub.s32 256, 256
      %29 = vsyncadd [#allocation6], %s28
      %s30 = sshll.u32 [#allocation5], 4
      %s31 = int_to_ptr.vmem [resolvable:$true] %s30
      %36 = dma.hbm_to_vmem [thread:$0]  %s1, 256, %s31, [#allocation6], 128, 128, 8
    $region9: #{tpu_custom_call.1} parent=1 // pred_fallthru
      _
    // Predicated region
    $region10: #{tpu_custom_call.1} parent=1 // pred_check
      _
    $region11: #{tpu_custom_call.1} parent=1 // pred_check_branch
      %38 = sbr.rel (0) target = $region13
    $region12: #{tpu_custom_call.1} parent=1 // pred_region
      _
    $region13: #{tpu_custom_call.1} parent=1 // pred_fallthru
      _
    // Predicated region
    $region14: #{tpu_custom_call.1} parent=1 // pred_check
      _
    $region15: #{tpu_custom_call.1} parent=1 // pred_check_branch
      %40 = sbr.rel (0) target = $region17
    $region16: #{tpu_custom_call.1} parent=1 // pred_region
      %s42 = ssub.s32 4096, 4096
      %43 = vsyncadd [#allocation6], %s42
      %s44 = sshll.u32 [#allocation7], 4
      %s45 = int_to_ptr.vmem [resolvable:$true] %s44
      %50 = dma.hbm_to_vmem [thread:$0]  %s3, 4096, %s45, [#allocation6], 128, 128, 8
    $region17: #{tpu_custom_call.1} parent=1 // pred_fallthru
      _
    // Predicated region
    $region18: #{tpu_custom_call.1} parent=1 // pred_check
      _
    $region19: #{tpu_custom_call.1} parent=1 // pred_check_branch
      %52 = sbr.rel (0) target = $region21
    $region20: #{tpu_custom_call.1} parent=1 // pred_region
      _
    $region21: #{tpu_custom_call.1} parent=1 // pred_fallthru
      _
    // Predicated region
    $region22: #{tpu_custom_call.1} parent=1 // pred_check
      _
    $region23: #{tpu_custom_call.1} parent=1 // pred_check_branch
      %54 = sbr.rel (0) target = $region25
    $region24: #{tpu_custom_call.1} parent=1 // pred_region
      _
    $region25: #{tpu_custom_call.1} parent=1 // pred_fallthru
      _
    // Predicated region
    $region26: #{tpu_custom_call.1} parent=1 // pred_check
      _
    $region27: #{tpu_custom_call.1} parent=1 // pred_check_branch
      %56 = sbr.rel (0) target = $region29
    $region28: #{tpu_custom_call.1} parent=1 // pred_region
      _
    $region29: #{tpu_custom_call.1} parent=1 // pred_fallthru
      _
    // Predicated region
    $region30: #{tpu_custom_call.1} parent=1 // pred_check
      _
    $region31: #{tpu_custom_call.1} parent=1 // pred_check_branch
      %58 = sbr.rel (0) target = $region33
    $region32: #{tpu_custom_call.1} parent=1 // pred_region
      %59 = dma.done [#allocation4], 128
    $region33: #{tpu_custom_call.1} parent=1 // pred_fallthru
      _
    // Predicated region
    $region34: #{tpu_custom_call.1} parent=1 // pred_check
      _
    $region35: #{tpu_custom_call.1} parent=1 // pred_check_branch
      %61 = sbr.rel (0) target = $region37
    $region36: #{tpu_custom_call.1} parent=1 // pred_region
      %62 = dma.done [#allocation6], 256
    $region37: #{tpu_custom_call.1} parent=1 // pred_fallthru
      _
    // Predicated region
    $region38: #{tpu_custom_call.1} parent=1 // pred_check
      _
    $region39: #{tpu_custom_call.1} parent=1 // pred_check_branch
      %64 = sbr.rel (0) target = $region41
    $region40: #{tpu_custom_call.1} parent=1 // pred_region
      %65 = dma.done [#allocation6], 4096
    $region41: #{tpu_custom_call.1} parent=1 // pred_fallthru
      _
    %v67 = vld [vmem:[#allocation3] sm:$0xff]
    %v68 = vpack.c.bf16 %v67, %v67
    %v69 = vld [vmem:[#allocation5] sm:$0xff]
    %v70 = vld [vmem:[#allocation5 + $0x8] sm:$0xff]
    %v71 = vld [vmem:[%s2] sm:$0x3]
    %v73 = vlaneseq
    %v74 = vshrl.u32 %v73, 7
    %v75 = vsub.s32 0, %v74
    %v76 = vrot.slane %v71, %v75
    %v77 = vlaneseq
    %v78 = vshrl.u32 %v77, 7
    %v79 = vsub.s32 1, %v78
    %v80 = vrot.slane %v71, %v79
    %v85 = vunpack.c.l.b16 %v69
    %v86 = vunpack.c.h.b16 %v69
    %v87 = vunpack.c.l.b16 %v70
    %v88 = vunpack.c.h.b16 %v70
    %v89 = vpack.c.b16 %v87, %v85
    %v90 = vpack.c.b16 %v88, %v86
    %vm93 = vcmask 130048
    %v95 = vsel %vm93, %v68, 0
    %97 = vmatprep.subr.bf16.mxu0 %v90
    %98 = vmatpush1.bf16.msra.mxu0 %v89
    %99 = vmatprep.subr.bf16.mxu0 0
    %100 = vmatpush1.bf16.msra.mxu0 0
    %101 = vmatprep.subr.bf16.mxu0 0
    %102 = vmatpush1.bf16.msra.mxu0 0
    %103 = vmatprep.subr.bf16.mxu0 0
    %104 = vmatpush1.bf16.msra.mxu0 0
    %105 = vmatprep.subr.bf16.mxu0 0
    %106 = vmatpush1.bf16.msra.mxu0 0
    %107 = vmatprep.subr.bf16.mxu0 0
    %108 = vmatpush1.bf16.msra.mxu0 0
    %109 = vmatprep.subr.bf16.mxu0 0
    %110 = vmatpush1.bf16.msra.mxu0 0
    %111 = vmatprep.subr.bf16.mxu0 0
    %112 = vmatpush1.bf16.msra.mxu0 0
    %113 = vmatprep.subr.bf16.mxu0 0
    %114 = vmatpush1.bf16.msra.mxu0 0
    %115 = vmatprep.subr.bf16.mxu0 0
    %116 = vmatpush1.bf16.msra.mxu0 0
    %117 = vmatprep.subr.bf16.mxu0 0
    %118 = vmatpush1.bf16.msra.mxu0 0
    %119 = vmatprep.subr.bf16.mxu0 0
    %120 = vmatpush1.bf16.msra.mxu0 0
    %121 = vmatprep.subr.bf16.mxu0 0
    %122 = vmatpush1.bf16.msra.mxu0 0
    %123 = vmatprep.subr.bf16.mxu0 0
    %124 = vmatpush1.bf16.msra.mxu0 0
    %125 = vmatprep.subr.bf16.mxu0 0
    %126 = vmatpush1.bf16.msra.mxu0 0
    %127 = vmatprep.subr.bf16.mxu0 0
    %128 = vmatpush1.bf16.msra.mxu0 0
    %129 = vmatprep.mubr.bf16.mxu0 0
    %130 = vmatmul.mubr.bf16.gmra.mrb[0].mxu0 %v95
    %v131 = vpop.f32.mrb[0].mxu0
    %v132 = vadd.f32 %v76, %v131
    %v133 = vpop.f32.mrb[0].mxu0
    %v134 = vadd.f32 %v80, %v133
    %v135 = vpop.f32.mrb[0].mxu0
    %v136 = vpop.f32.mrb[0].mxu0
    %137 = vdwg.mxu0
    %v138 = vmax.f32 %v132, 0.0
    %v139 = vmax.f32 %v134, 0.0
    %v140 = vpack.c.bf16 %v138, %v138
    %v141 = vpack.c.bf16 %v139, %v139
    %v142 = vld [vmem:[#allocation7] sm:$0xff]
    %v143 = vld [vmem:[#allocation7 + $0x8] sm:$0xff]
    %v144 = vld [vmem:[#allocation7 + $0x10] sm:$0xff]
    %v145 = vld [vmem:[#allocation7 + $0x18] sm:$0xff]
    %v146 = vld [vmem:[#allocation7 + $0x20] sm:$0xff]
    %v147 = vld [vmem:[#allocation7 + $0x28] sm:$0xff]
    %v148 = vld [vmem:[#allocation7 + $0x30] sm:$0xff]
    %v149 = vld [vmem:[#allocation7 + $0x38] sm:$0xff]
    %v150 = vld [vmem:[#allocation7 + $0x40] sm:$0xff]
    %v151 = vld [vmem:[#allocation7 + $0x48] sm:$0xff]
    %v152 = vld [vmem:[#allocation7 + $0x50] sm:$0xff]
    %v153 = vld [vmem:[#allocation7 + $0x58] sm:$0xff]
    %v154 = vld [vmem:[#allocation7 + $0x60] sm:$0xff]
    %v155 = vld [vmem:[#allocation7 + $0x68] sm:$0xff]
    %v156 = vld [vmem:[#allocation7 + $0x70] sm:$0xff]
    %v157 = vld [vmem:[#allocation7 + $0x78] sm:$0xff]
    %v158 = vld [vmem:[#allocation7 + $0x80] sm:$0xff]
    %v159 = vld [vmem:[#allocation7 + $0x88] sm:$0xff]
    %v160 = vld [vmem:[#allocation7 + $0x90] sm:$0xff]
    %v161 = vld [vmem:[#allocation7 + $0x98] sm:$0xff]
    %v162 = vld [vmem:[#allocation7 + $0xa0] sm:$0xff]
    %v163 = vld [vmem:[#allocation7 + $0xa8] sm:$0xff]
    %v164 = vld [vmem:[#allocation7 + $0xb0] sm:$0xff]
    %v165 = vld [vmem:[#allocation7 + $0xb8] sm:$0xff]
    %v166 = vld [vmem:[#allocation7 + $0xc0] sm:$0xff]
    %v167 = vld [vmem:[#allocation7 + $0xc8] sm:$0xff]
    %v168 = vld [vmem:[#allocation7 + $0xd0] sm:$0xff]
    %v169 = vld [vmem:[#allocation7 + $0xd8] sm:$0xff]
    %v170 = vld [vmem:[#allocation7 + $0xe0] sm:$0xff]
    %v171 = vld [vmem:[#allocation7 + $0xe8] sm:$0xff]
    %v172 = vld [vmem:[#allocation7 + $0xf0] sm:$0xff]
    %v173 = vld [vmem:[#allocation7 + $0xf8] sm:$0xff]
    %v174 = vld [vmem:[%s4] sm:$0x3]
    %v176 = vlaneseq
    %v177 = vshrl.u32 %v176, 7
    %v178 = vsub.s32 0, %v177
    %v179 = vrot.slane %v174, %v178
    %v180 = vlaneseq
    %v181 = vshrl.u32 %v180, 7
    %v182 = vsub.s32 1, %v181
    %v183 = vrot.slane %v174, %v182
    %v218 = vunpack.c.l.b16 %v142
    %v219 = vunpack.c.h.b16 %v142
    %v220 = vunpack.c.l.b16 %v143
    %v221 = vunpack.c.h.b16 %v143
    %v222 = vunpack.c.l.b16 %v144
    %v223 = vunpack.c.h.b16 %v144
    %v224 = vunpack.c.l.b16 %v145
    %v225 = vunpack.c.h.b16 %v145
    %v226 = vunpack.c.l.b16 %v146
    %v227 = vunpack.c.h.b16 %v146
    %v228 = vunpack.c.l.b16 %v147
    %v229 = vunpack.c.h.b16 %v147
    %v230 = vunpack.c.l.b16 %v148
    %v231 = vunpack.c.h.b16 %v148
    %v232 = vunpack.c.l.b16 %v149
    %v233 = vunpack.c.h.b16 %v149
    %v234 = vunpack.c.l.b16 %v150
    %v235 = vunpack.c.h.b16 %v150
    %v236 = vunpack.c.l.b16 %v151
    %v237 = vunpack.c.h.b16 %v151
    %v238 = vunpack.c.l.b16 %v152
    %v239 = vunpack.c.h.b16 %v152
    %v240 = vunpack.c.l.b16 %v153
    %v241 = vunpack.c.h.b16 %v153
    %v242 = vunpack.c.l.b16 %v154
    %v243 = vunpack.c.h.b16 %v154
    %v244 = vunpack.c.l.b16 %v155
    %v245 = vunpack.c.h.b16 %v155
    %v246 = vunpack.c.l.b16 %v156
    %v247 = vunpack.c.h.b16 %v156
    %v248 = vunpack.c.l.b16 %v157
    %v249 = vunpack.c.h.b16 %v157
    %v250 = vunpack.c.l.b16 %v158
    %v251 = vunpack.c.h.b16 %v158
    %v252 = vunpack.c.l.b16 %v159
    %v253 = vunpack.c.h.b16 %v159
    %v254 = vunpack.c.l.b16 %v160
    %v255 = vunpack.c.h.b16 %v160
    %v256 = vunpack.c.l.b16 %v161
    %v257 = vunpack.c.h.b16 %v161
    %v258 = vunpack.c.l.b16 %v162
    %v259 = vunpack.c.h.b16 %v162
    %v260 = vunpack.c.l.b16 %v163
    %v261 = vunpack.c.h.b16 %v163
    %v262 = vunpack.c.l.b16 %v164
    %v263 = vunpack.c.h.b16 %v164
    %v264 = vunpack.c.l.b16 %v165
    %v265 = vunpack.c.h.b16 %v165
    %v266 = vunpack.c.l.b16 %v166
    %v267 = vunpack.c.h.b16 %v166
    %v268 = vunpack.c.l.b16 %v167
    %v269 = vunpack.c.h.b16 %v167
    %v270 = vunpack.c.l.b16 %v168
    %v271 = vunpack.c.h.b16 %v168
    %v272 = vunpack.c.l.b16 %v169
    %v273 = vunpack.c.h.b16 %v169
    %v274 = vunpack.c.l.b16 %v170
    %v275 = vunpack.c.h.b16 %v170
    %v276 = vunpack.c.l.b16 %v171
    %v277 = vunpack.c.h.b16 %v171
    %v278 = vunpack.c.l.b16 %v172
    %v279 = vunpack.c.h.b16 %v172
    %v280 = vunpack.c.l.b16 %v173
    %v281 = vunpack.c.h.b16 %v173
    %v282 = vpack.c.b16 %v220, %v218
    %v283 = vpack.c.b16 %v221, %v219
    %v284 = vpack.c.b16 %v224, %v222
    %v285 = vpack.c.b16 %v225, %v223
    %v286 = vpack.c.b16 %v228, %v226
    %v287 = vpack.c.b16 %v229, %v227
    %v288 = vpack.c.b16 %v232, %v230
    %v289 = vpack.c.b16 %v233, %v231
    %v290 = vpack.c.b16 %v236, %v234
    %v291 = vpack.c.b16 %v237, %v235
    %v292 = vpack.c.b16 %v240, %v238
    %v293 = vpack.c.b16 %v241, %v239
    %v294 = vpack.c.b16 %v244, %v242
    %v295 = vpack.c.b16 %v245, %v243
    %v296 = vpack.c.b16 %v248, %v246
    %v297 = vpack.c.b16 %v249, %v247
    %v298 = vpack.c.b16 %v252, %v250
    %v299 = vpack.c.b16 %v253, %v251
    %v300 = vpack.c.b16 %v256, %v254
    %v301 = vpack.c.b16 %v257, %v255
    %v302 = vpack.c.b16 %v260, %v258
    %v303 = vpack.c.b16 %v261, %v259
    %v304 = vpack.c.b16 %v264, %v262
    %v305 = vpack.c.b16 %v265, %v263
    %v306 = vpack.c.b16 %v268, %v266
    %v307 = vpack.c.b16 %v269, %v267
    %v308 = vpack.c.b16 %v272, %v270
    %v309 = vpack.c.b16 %v273, %v271
    %v310 = vpack.c.b16 %v276, %v274
    %v311 = vpack.c.b16 %v277, %v275
    %v312 = vpack.c.b16 %v280, %v278
    %v313 = vpack.c.b16 %v281, %v279
    %346 = vmatprep.subr.bf16.mxu0 %v283
    %347 = vmatpush1.bf16.msra.mxu0 %v282
    %348 = vmatprep.subr.bf16.mxu0 %v285
    %349 = vmatpush1.bf16.msra.mxu0 %v284
    %350 = vmatprep.subr.bf16.mxu0 %v287
    %351 = vmatpush1.bf16.msra.mxu0 %v286
    %352 = vmatprep.subr.bf16.mxu0 %v289
    %353 = vmatpush1.bf16.msra.mxu0 %v288
    %354 = vmatprep.subr.bf16.mxu0 %v291
    %355 = vmatpush1.bf16.msra.mxu0 %v290
    %356 = vmatprep.subr.bf16.mxu0 %v293
    %357 = vmatpush1.bf16.msra.mxu0 %v292
    %358 = vmatprep.subr.bf16.mxu0 %v295
    %359 = vmatpush1.bf16.msra.mxu0 %v294
    %360 = vmatprep.subr.bf16.mxu0 %v297
    %361 = vmatpush1.bf16.msra.mxu0 %v296
    %362 = vmatprep.subr.bf16.mxu0 %v299
    %363 = vmatpush1.bf16.msra.mxu0 %v298
    %364 = vmatprep.subr.bf16.mxu0 %v301
    %365 = vmatpush1.bf16.msra.mxu0 %v300
    %366 = vmatprep.subr.bf16.mxu0 %v303
    %367 = vmatpush1.bf16.msra.mxu0 %v302
    %368 = vmatprep.subr.bf16.mxu0 %v305
    %369 = vmatpush1.bf16.msra.mxu0 %v304
    %370 = vmatprep.subr.bf16.mxu0 %v307
    %371 = vmatpush1.bf16.msra.mxu0 %v306
    %372 = vmatprep.subr.bf16.mxu0 %v309
    %373 = vmatpush1.bf16.msra.mxu0 %v308
    %374 = vmatprep.subr.bf16.mxu0 %v311
    %375 = vmatpush1.bf16.msra.mxu0 %v310
    %376 = vmatprep.subr.bf16.mxu0 %v313
    %377 = vmatpush1.bf16.msra.mxu0 %v312
    %378 = vmatprep.mubr.bf16.mxu0 %v141
    %379 = vmatmul.mubr.bf16.gmra.mrb[0].mxu0 %v140
    %v380 = vpop.f32.mrb[0].mxu0
    %v381 = vadd.f32 %v179, %v380
    %v382 = vpop.f32.mrb[0].mxu0
    %v383 = vadd.f32 %v183, %v382
    %v384 = vpop.f32.mrb[0].mxu0
    %v385 = vpop.f32.mrb[0].mxu0
    %386 = vdwg.mxu0
    %v387 = vmax.f32 %v381, 0.0
    %v388 = vmax.f32 %v383, 0.0
    %v389 = vld [vmem:[%s5] sm:$0x3]
    %v391 = vlaneseq
    %v392 = vshrl.u32 %v391, 7
    %v393 = vsub.s32 0, %v392
    %v394 = vrot.slane %v389, %v393
    %v395 = vlaneseq
    %v396 = vshrl.u32 %v395, 7
    %v397 = vsub.s32 1, %v396
    %v398 = vrot.slane %v389, %v397
    %v401 = vmul.f32 %v387, %v394
    %v402 = vmul.f32 %v388, %v398
    %v403 = vadd.f32 %v401, %v402
    %404 = vadd.xlane.f32.xlu0 %v403
    %v405 = vpop.xlane.xlu0 %404
    %s406 = sld [smem:[#allocation2]]
    %v407 = vstv %s406
    %v408 = vadd.f32 %v405, %v407
    %v409 = vsub.f32 0.0, %v408
    %v410 = vmul.f32 %v409, 1.442695
    %v411 = vpow.pop %v410
    %v412 = vadd.f32 %v411, 1.0
    %v413 = vrcp.pop %v412
    %v414 = vmul.f32 1.0, %v413
    %vm415 = vcmask 7168
    %416 = vst.msk [vmem:[%s7] sm:$0xff] %vm415, %v414
    // Predicated region
    $region42: #{tpu_custom_call.1} parent=1 // pred_check
      _
    $region43: #{tpu_custom_call.1} parent=1 // pred_check_branch
      %418 = sbr.rel (0) target = $region45
    $region44: #{tpu_custom_call.1} parent=1 // pred_region
      _
    $region45: #{tpu_custom_call.1} parent=1 // pred_fallthru
      _
    // Predicated region
    $region46: #{tpu_custom_call.1} parent=1 // pred_check
      _
    $region47: #{tpu_custom_call.1} parent=1 // pred_check_branch
      %420 = sbr.rel (0) target = $region49
    $region48: #{tpu_custom_call.1} parent=1 // pred_region
      _
    $region49: #{tpu_custom_call.1} parent=1 // pred_fallthru
      _
    %421 = vsyncpa [#allocation4], 1
    %422 = vsyncpa [#allocation6], 1

</llo_original>
